<compile_context>
chip_gen: v6e
topology: v6e:2x2x1
jax: 0.10.0
libtpu: 0.0.40
codegen_flags: <defaults>
</compile_context>

<pallas_src>
import functools

import jax
import jax.numpy as jnp
from jax.experimental import pallas as pl
from jax.experimental.pallas import tpu as pltpu


# ----------------------------------------------------------------------------- helpers
def make_divisible(v, divisor, min_value=None):
    if min_value is None:
        min_value = divisor
    new_v = max(min_value, int(v + divisor / 2) // divisor * divisor)
    if new_v < 0.9 * v:
        new_v += divisor
    return new_v


def _ceil_to(x, m):
    return ((x + m - 1) // m) * m


def bn_fold(gamma, beta, mean, var, eps=1e-5):
    s = gamma / jnp.sqrt(var + eps)
    return s, beta - mean * s


# ------------------------------------------------------------------------ Pallas kernels
def _fused_matmul_kernel(a_ref, w_ref, s_ref, b_ref, *rest, relu, has_skip):
    """(TM, K) @ (K, N) with fused BN (scale/bias), optional ReLU, optional residual add."""
    if has_skip:
        skip_ref, o_ref = rest
    else:
        (o_ref,) = rest
    acc = jnp.dot(a_ref[...], w_ref[...], preferred_element_type=jnp.float32)
    y = acc * s_ref[...] + b_ref[...]
    if relu:
        y = jnp.maximum(y, 0.0)
    if has_skip:
        y = y + skip_ref[...].astype(jnp.float32)
    o_ref[...] = y.astype(o_ref.dtype)


def _dw_kernel(x_ref, w_ref, s_ref, b_ref, o_ref, *, H, W):
    """Depthwise 3x3 (stride 1, pad already applied) with fused BN + ReLU.

    x_ref: (1, H+2, W+2, C) padded input (bf16), taps extracted in-kernel (no 9x blowup).
    w_ref: (9, 1, C) f32 taps, s_ref/b_ref: (1, C) f32.
    """
    C = x_ref.shape[-1]
    acc = jnp.zeros((H, W, C), jnp.float32)
    for ky in range(3):
        for kx in range(3):
            tap = x_ref[0, pl.ds(ky, H), pl.ds(kx, W), :].astype(jnp.float32)
            acc = acc + tap * w_ref[3 * ky + kx]
    y = jnp.maximum(acc * s_ref[...] + b_ref[...], 0.0)
    o_ref[0] = y.astype(o_ref.dtype)


def _pool_fc_kernel(x_ref, w_ref, s_ref, b_ref, o_ref, *, inv_hw):
    """Global average pool over spatial axis fused with the classifier 1x1 conv + BN."""
    x = x_ref[0].astype(jnp.float32)                         # [HW, C]
    pooled = jnp.sum(x, axis=0, keepdims=True) * inv_hw      # [1, C]
    y = jnp.dot(pooled, w_ref[...], preferred_element_type=jnp.float32)  # [1, n_classes]
    o_ref[0] = y * s_ref[...] + b_ref[...]


# --------------------------------------------------------------------- Pallas wrappers
def _choose_tm(M):
    """Pick a row-tile TM (multiple of 8, <=512) and padded M."""
    Mp = _ceil_to(M, 8)
    if Mp <= 512:
        return Mp, Mp
    TM = 512
    return TM, _ceil_to(M, TM)


def fused_matmul_bn(a, w, scale, bias, relu, skip=None, out_dtype=jnp.bfloat16):
    """a: [M, K], w: [K, N], scale/bias: [N], optional skip: [M, N] -> [M, N]."""
    M, K = a.shape
    _, N = w.shape

    a = a.astype(jnp.bfloat16)
    w = w.astype(jnp.bfloat16)
    scale = scale.reshape(1, N).astype(jnp.float32)
    bias = bias.reshape(1, N).astype(jnp.float32)
    if skip is not None:
        skip = skip.astype(jnp.bfloat16)

    TM, Mp = _choose_tm(M)
    if Mp != M:
        a = jnp.pad(a, ((0, Mp - M), (0, 0)))
        if skip is not None:
            skip = jnp.pad(skip, ((0, Mp - M), (0, 0)))

    in_specs = [
        pl.BlockSpec((TM, K), lambda i: (i, 0)),
        pl.BlockSpec((K, N), lambda i: (0, 0)),
        pl.BlockSpec((1, N), lambda i: (0, 0)),
        pl.BlockSpec((1, N), lambda i: (0, 0)),
    ]
    args = [a, w, scale, bias]
    if skip is not None:
        in_specs.append(pl.BlockSpec((TM, N), lambda i: (i, 0)))
        args.append(skip)

    out = pl.pallas_call(
        functools.partial(_fused_matmul_kernel, relu=relu, has_skip=skip is not None),
        out_shape=jax.ShapeDtypeStruct((Mp, N), out_dtype),
        grid=(Mp // TM,),
        in_specs=in_specs,
        out_specs=pl.BlockSpec((TM, N), lambda i: (i, 0)),
        compiler_params=pltpu.CompilerParams(dimension_semantics=("parallel",)),
    )(*args)
    if Mp != M:
        out = out[:M]
    return out


def conv3x3_bn_relu(x, w, scale, bias, stride):
    """x: [N,H,W,Cin], w: [3,3,Cin,Cout]; padding=1; fused BN + ReLU."""
    N, H, W, Cin = x.shape
    Cout = w.shape[-1]
    s = stride
    Ho = (H + 2 - 3) // s + 1
    Wo = (W + 2 - 3) // s + 1
    xp = jnp.pad(x, ((0, 0), (1, 1), (1, 1), (0, 0)))
    cols = []
    for ky in range(3):
        for kx in range(3):
            cols.append(xp[:, ky:ky + s * (Ho - 1) + 1:s, kx:kx + s * (Wo - 1) + 1:s, :])
    patches = jnp.concatenate(cols, axis=-1).reshape(N * Ho * Wo, 9 * Cin)
    w_flat = w.reshape(9 * Cin, Cout)  # (ky, kx, cin) ordering matches concat above
    out = fused_matmul_bn(patches, w_flat, scale, bias, relu=True)
    return out.reshape(N, Ho, Wo, Cout)


def conv1x1_bn(x, w, scale, bias, relu, skip=None):
    """x: [N,H,W,Cin], w: [Cin, Cout]; fused BN (+ optional ReLU, optional residual)."""
    N, H, W, Cin = x.shape
    Cout = w.shape[-1]
    skip2d = None if skip is None else skip.reshape(N * H * W, Cout)
    out = fused_matmul_bn(x.reshape(N * H * W, Cin), w, scale, bias, relu, skip=skip2d)
    return out.reshape(N, H, W, Cout)


def depthwise3x3_bn_relu(x, w_dw, scale, bias, stride):
    """x: [N,H,W,C], w_dw: [3,3,C]; padding=1, groups=C; fused BN + ReLU.

    Taps are extracted in-kernel from the halo'd NHWC block (no 9x HBM expansion).
    For stride>1 the stride-1 result is computed and subsampled in the wrapper.
    """
    B, H, W, C = x.shape
    xp = jnp.pad(x.astype(jnp.bfloat16), ((0, 0), (1, 1), (1, 1), (0, 0)))
    w9 = w_dw.reshape(9, 1, C).astype(jnp.float32)
    s2 = scale.reshape(1, C).astype(jnp.float32)
    b2 = bias.reshape(1, C).astype(jnp.float32)

    out = pl.pallas_call(
        functools.partial(_dw_kernel, H=H, W=W),
        out_shape=jax.ShapeDtypeStruct((B, H, W, C), jnp.bfloat16),
        grid=(B,),
        in_specs=[
            pl.BlockSpec((1, H + 2, W + 2, C), lambda b: (b, 0, 0, 0)),
            pl.BlockSpec((9, 1, C), lambda b: (0, 0, 0)),
            pl.BlockSpec((1, C), lambda b: (0, 0)),
            pl.BlockSpec((1, C), lambda b: (0, 0)),
        ],
        out_specs=pl.BlockSpec((1, H, W, C), lambda b: (b, 0, 0, 0)),
        compiler_params=pltpu.CompilerParams(dimension_semantics=("parallel",)),
    )(xp, w9, s2, b2)

    if stride > 1:
        out = out[:, ::stride, ::stride, :]
    return out


def pool_classifier(x, w, scale, bias):
    """AdaptiveAvgPool2d((1,1)) fused with the classifier 1x1 conv + BN.

    Exact reordering: pool and the (conv+BN) are both linear, no nonlinearity between them.
    x: [N,H,W,C], w: [C, n_classes] -> logits [N, n_classes] (f32).
    """
    B, H, W, C = x.shape
    HW = H * W
    n_classes = w.shape[-1]
    xr = x.reshape(B, HW, C)

    out = pl.pallas_call(
        functools.partial(_pool_fc_kernel, inv_hw=1.0 / HW),
        out_shape=jax.ShapeDtypeStruct((B, 1, n_classes), jnp.float32),
        grid=(B,),
        in_specs=[
            pl.BlockSpec((1, HW, C), lambda b: (b, 0, 0)),
            pl.BlockSpec((C, n_classes), lambda b: (0, 0)),
            pl.BlockSpec((1, n_classes), lambda b: (0, 0)),
            pl.BlockSpec((1, n_classes), lambda b: (0, 0)),
        ],
        out_specs=pl.BlockSpec((1, 1, n_classes), lambda b: (b, 0, 0)),
        compiler_params=pltpu.CompilerParams(dimension_semantics=("parallel",)),
    )(xr, w.astype(jnp.float32),
      scale.reshape(1, n_classes).astype(jnp.float32),
      bias.reshape(1, n_classes).astype(jnp.float32))
    return out.reshape(B, n_classes)


# --------------------------------------------------------------- parameter construction
def _init_conv(key, kh, kw, cin, cout):
    fan_in = kh * kw * cin
    return jax.random.normal(key, (kh, kw, cin, cout), jnp.float32) * (2.0 / fan_in) ** 0.5


def _init_dw(key, c):
    return jax.random.normal(key, (3, 3, c), jnp.float32) * (2.0 / 9.0) ** 0.5


def _init_bn(key, c):
    k1, k2, k3, k4 = jax.random.split(key, 4)
    gamma = jax.random.uniform(k1, (c,), jnp.float32, 0.5, 1.5)
    beta = 0.1 * jax.random.normal(k2, (c,), jnp.float32)
    mean = 0.1 * jax.random.normal(k3, (c,), jnp.float32)
    var = jax.random.uniform(k4, (c,), jnp.float32, 0.5, 1.5)
    return bn_fold(gamma, beta, mean, var)


def build_params(key, config):
    n_classes = config["n_classes"]
    in_channels = config["in_channels"]
    base_channels = make_divisible(config["base_channels"], 8)
    channels_multiplier = config["channels_multiplier"]
    expansion_rate = config["expansion_rate"]
    n_blocks = config["n_blocks"]
    strides_cfg = config["strides"]
    n_stages = len(n_blocks)

    channels_per_stage = [base_channels] + [
        make_divisible(base_channels * channels_multiplier ** sid, 8) for sid in range(n_stages)
    ]

    keys = iter(jax.random.split(key, 256))
    params = {}

    # stem: two Conv2dNormActivation(k=3, s=2, pad=1, BN, ReLU)
    c_quarter = channels_per_stage[0] // 4
    params["in_c0"] = dict(w=_init_conv(next(keys), 3, 3, in_channels, c_quarter))
    params["in_c0"]["scale"], params["in_c0"]["bias"] = _init_bn(next(keys), c_quarter)
    params["in_c1"] = dict(w=_init_conv(next(keys), 3, 3, c_quarter, channels_per_stage[0]))
    params["in_c1"]["scale"], params["in_c1"]["bias"] = _init_bn(next(keys), channels_per_stage[0])

    # stages of inverted-residual blocks
    blocks = []
    block_id = 0
    for stage_id in range(n_stages):
        cin = channels_per_stage[stage_id]
        cout = channels_per_stage[stage_id + 1]
        for _ in range(n_blocks[stage_id]):
            block_id += 1
            bname = f"b{block_id}"
            stride = strides_cfg.get(bname, (1, 1))
            assert stride[0] == stride[1], "only square strides supported"
            s = int(stride[0])
            exp_c = make_divisible(int(expansion_rate * cin), 8)

            blk = {"stride": s, "residual": (s == 1 and cin == cout)}
            blk["exp_w"] = _init_conv(next(keys), 1, 1, cin, exp_c).reshape(cin, exp_c)
            blk["exp_s"], blk["exp_b"] = _init_bn(next(keys), exp_c)
            blk["dw_w"] = _init_dw(next(keys), exp_c)
            blk["dw_s"], blk["dw_b"] = _init_bn(next(keys), exp_c)
            blk["proj_w"] = _init_conv(next(keys), 1, 1, exp_c, cout).reshape(exp_c, cout)
            blk["proj_s"], blk["proj_b"] = _init_bn(next(keys), cout)
            blocks.append(blk)
            cin = cout
    params["blocks"] = blocks

    # feed_forward: Conv2d(1x1, bias=False) + BatchNorm2d + AdaptiveAvgPool2d((1,1))
    params["ff_w"] = _init_conv(next(keys), 1, 1, channels_per_stage[-1], n_classes).reshape(
        channels_per_stage[-1], n_classes
    )
    params["ff_s"], params["ff_b"] = _init_bn(next(keys), n_classes)
    return params


# ------------------------------------------------------------------------------ forward
def network_forward(x_nchw, params):
    """Network_1.forward with quantize=False, mel_forward=False. Returns logits [N, n_classes]."""
    x = jnp.transpose(x_nchw, (0, 2, 3, 1)).astype(jnp.float32)  # NCHW -> NHWC

    # in_c
    x = conv3x3_bn_relu(x, params["in_c0"]["w"], params["in_c0"]["scale"],
                        params["in_c0"]["bias"], stride=2)
    x = conv3x3_bn_relu(x, params["in_c1"]["w"], params["in_c1"]["scale"],
                        params["in_c1"]["bias"], stride=2)

    # stages (inverted-residual blocks; residual add fused into the project conv kernel)
    for blk in params["blocks"]:
        y = conv1x1_bn(x, blk["exp_w"], blk["exp_s"], blk["exp_b"], relu=True)
        y = depthwise3x3_bn_relu(y, blk["dw_w"], blk["dw_s"], blk["dw_b"], stride=blk["stride"])
        skip = x if blk["residual"] else None
        y = conv1x1_bn(y, blk["proj_w"], blk["proj_s"], blk["proj_b"], relu=False, skip=skip)
        x = y

    # feed_forward: pool fused with the 1x1 classifier conv + BN (pool moved before conv; exact)
    logits = pool_classifier(x, params["ff_w"], params["ff_s"], params["ff_b"])
    return logits


# --------------------------------------------------------------------------------- main
if __name__ == "__main__":
    config = dict(
        n_classes=10,
        in_channels=1,
        base_channels=16,
        channels_multiplier=2.0,
        expansion_rate=2.0,
        n_blocks=(1, 1),
        strides={"b2": (2, 2)},
    )

    key = jax.random.PRNGKey(0)
    k_params, k_x = jax.random.split(key)
    params = build_params(k_params, config)

    # small deterministic input (tiny mel-spectrogram-like patch), NCHW like PyTorch
    x = jax.random.normal(k_x, (2, config["in_channels"], 32, 32), jnp.float32)

    logits = network_forward(x, params)
    logits = jax.block_until_ready(logits)

    assert logits.shape == (2, config["n_classes"]), logits.shape
    assert bool(jnp.all(jnp.isfinite(logits)))
    print("KERNEL_OK")
</pallas_src>

<mosaic_0001>
module attributes {stable_mosaic.version = 11 : i64} {
  func.func @_fused_matmul_kernel(%arg0: i32, %arg1: memref<512x9xbf16, #tpu.memory_space<vmem>>, %arg2: memref<9x4xbf16, #tpu.memory_space<vmem>>, %arg3: memref<1x4xf32, #tpu.memory_space<vmem>>, %arg4: memref<1x4xf32, #tpu.memory_space<vmem>>, %arg5: memref<512x4xbf16, #tpu.memory_space<vmem>>) attributes {dimension_semantics = [#tpu.dimension_semantics<parallel>], iteration_bounds = array<i64: 1>, scalar_prefetch = 0 : i64, scratch_operands = 0 : i64, tpu.core_type = #tpu.core_type<tc>, window_params = [{transform_indices = @transform_0, window_bounds = array<i64: 512, 9>}, {pipeline_mode = #tpu.pipeline_mode<synchronous>, transform_indices = @transform_1, window_bounds = array<i64: 9, 4>}, {pipeline_mode = #tpu.pipeline_mode<synchronous>, transform_indices = @transform_2, window_bounds = array<i64: 1, 4>}, {pipeline_mode = #tpu.pipeline_mode<synchronous>, transform_indices = @transform_3, window_bounds = array<i64: 1, 4>}, {transform_indices = @transform_4, window_bounds = array<i64: 512, 4>}]} {
    %c0 = arith.constant 0 : index
    %c0_0 = arith.constant 0 : index
    %0 = vector.load %arg1[%c0, %c0_0] : memref<512x9xbf16, #tpu.memory_space<vmem>>, vector<512x9xbf16>
    %c0_1 = arith.constant 0 : index
    %c0_2 = arith.constant 0 : index
    %1 = vector.load %arg2[%c0_1, %c0_2] : memref<9x4xbf16, #tpu.memory_space<vmem>>, vector<9x4xbf16>
    %cst = arith.constant dense<0.000000e+00> : vector<512x4xf32>
    %2 = tpu.matmul %0, %1, %cst {dimension_numbers = #tpu.dot_dimension_numbers<[1], [0], [0], [1], [0, 0, 1, 1], [], []>} : vector<512x9xbf16>, vector<9x4xbf16>, vector<512x4xf32> -> vector<512x4xf32>
    %c0_3 = arith.constant 0 : index
    %c0_4 = arith.constant 0 : index
    %3 = vector.load %arg3[%c0_3, %c0_4] : memref<1x4xf32, #tpu.memory_space<vmem>>, vector<1x4xf32>
    %4 = vector.broadcast %3 : vector<1x4xf32> to vector<512x4xf32>
    %5 = arith.mulf %2, %4 : vector<512x4xf32>
    %c0_5 = arith.constant 0 : index
    %c0_6 = arith.constant 0 : index
    %6 = vector.load %arg4[%c0_5, %c0_6] : memref<1x4xf32, #tpu.memory_space<vmem>>, vector<1x4xf32>
    %7 = vector.broadcast %6 : vector<1x4xf32> to vector<512x4xf32>
    %8 = arith.addf %5, %7 : vector<512x4xf32>
    %cst_7 = arith.constant 0.000000e+00 : f32
    %9 = vector.broadcast %cst_7 : f32 to vector<512x4xf32>
    %10 = arith.maximumf %8, %9 : vector<512x4xf32>
    %11 = arith.truncf %10 : vector<512x4xf32> to vector<512x4xbf16>
    %c0_8 = arith.constant 0 : index
    %c0_9 = arith.constant 0 : index
    %12 = vector.load %arg5[%c0_8, %c0_9] : memref<512x4xbf16, #tpu.memory_space<vmem>>, vector<512x4xbf16>
    tpu.vector_store %arg5[%c0_8, %c0_9], %11 {strides = array<i32>} : memref<512x4xbf16, #tpu.memory_space<vmem>>, vector<512x4xbf16>,
    return
  }
  func.func @transform_0(%arg0: i32) -> (i32, i32) {
    %c0_i32 = arith.constant 0 : i32
    %c0_i32_0 = arith.constant 0 : i32
    return %arg0, %c0_i32 : i32, i32
  }
  func.func @transform_1(%arg0: i32) -> (i32, i32) {
    %c0_i32 = arith.constant 0 : i32
    %c0_i32_0 = arith.constant 0 : i32
    %c0_i32_1 = arith.constant 0 : i32
    return %c0_i32, %c0_i32_0 : i32, i32
  }
  func.func @transform_2(%arg0: i32) -> (i32, i32) {
    %c0_i32 = arith.constant 0 : i32
    %c0_i32_0 = arith.constant 0 : i32
    %c0_i32_1 = arith.constant 0 : i32
    return %c0_i32, %c0_i32_0 : i32, i32
  }
  func.func @transform_3(%arg0: i32) -> (i32, i32) {
    %c0_i32 = arith.constant 0 : i32
    %c0_i32_0 = arith.constant 0 : i32
    %c0_i32_1 = arith.constant 0 : i32
    return %c0_i32, %c0_i32_0 : i32, i32
  }
  func.func @transform_4(%arg0: i32) -> (i32, i32) {
    %c0_i32 = arith.constant 0 : i32
    %c0_i32_0 = arith.constant 0 : i32
    return %arg0, %c0_i32 : i32, i32
  }
}

</mosaic_0001>

<llo_original>
// kernel: tpu_custom_call.1
$region0: #{tpu_custom_call.1}
  #allocation0 [shape = 'u32[]', space=smem, size = 0x4, offset = 0x4, fixed_abs, tag = 'smem constant byte address 0x4 - core index']
  #allocation1 [shape = 'u32[144,128]{1,0:T(1,128)}', space=vmem, size = 0x12000, scoped, tag = 'internal scratch']
  %s0 = inlined_call_operand.vmem [shape: bf16[512,9], index: 0, kind: input, shape index: {}]
  %s1 = inlined_call_operand.vmem [shape: bf16[9,4], index: 1, kind: input, shape index: {}]
  %s2 = inlined_call_operand.vmem [shape: f32[1,4], index: 2, kind: input, shape index: {}]
  %s3 = inlined_call_operand.vmem [shape: f32[1,4], index: 3, kind: input, shape index: {}]
  %s4 = inlined_call_operand.vmem [shape: bf16[512,4], index: 4, kind: output, shape index: {}]
  %s5 = sld [smem:[#allocation0]]
  $region26: #{tpu_custom_call.1} parent=0
    _
  %s7 = ssub.s32 1, %s5
  %s8 = scalar_select 0, %s7, %s5
  // Predicated region
  $region2: #{tpu_custom_call.1} parent=0 // pred_check
    _
  $region3: #{tpu_custom_call.1} parent=0 // pred_check_branch
    %10 = sbr.rel (0) target = $region5
  $region4: #{tpu_custom_call.1} parent=0 // pred_region
    _
  $region5: #{tpu_custom_call.1} parent=0 // pred_fallthru
    _
  // Predicated region
  $region6: #{tpu_custom_call.1} parent=0 // pred_check
    _
  $region7: #{tpu_custom_call.1} parent=0 // pred_check_branch
    %12 = sbr.rel (0) target = $region9
  $region8: #{tpu_custom_call.1} parent=0 // pred_region
    _
  $region9: #{tpu_custom_call.1} parent=0 // pred_fallthru
    _
  // Predicated region
  $region10: #{tpu_custom_call.1} parent=0 // pred_check
    _
  $region11: #{tpu_custom_call.1} parent=0 // pred_check_branch
    %14 = sbr.rel (0) target = $region13
  $region12: #{tpu_custom_call.1} parent=0 // pred_region
    _
  $region13: #{tpu_custom_call.1} parent=0 // pred_fallthru
    _
  // Predicated region
  $region14: #{tpu_custom_call.1} parent=0 // pred_check
    _
  $region15: #{tpu_custom_call.1} parent=0 // pred_check_branch
    %16 = sbr.rel (0) target = $region17
  $region16: #{tpu_custom_call.1} parent=0 // pred_region
    _
  $region17: #{tpu_custom_call.1} parent=0 // pred_fallthru
    _
  %v18 = vld [vmem:[%s0] sm:$0xf]
  %v19 = vld [vmem:[%s0 + $0x4] sm:$0xf]
  %v20 = vld [vmem:[%s0 + $0x8] sm:$0xf]
  %v21 = vld [vmem:[%s0 + $0xc] sm:$0xf]
  %v22 = vld [vmem:[%s0 + $0x10] sm:$0xf]
  %v23 = vld [vmem:[%s0 + $0x14] sm:$0xf]
  %v24 = vld [vmem:[%s0 + $0x18] sm:$0xf]
  %v25 = vld [vmem:[%s0 + $0x1c] sm:$0xf]
  %v26 = vld [vmem:[%s0 + $0x20] sm:$0xf]
  %v27 = vld [vmem:[%s0 + $0x24] sm:$0xf]
  %v28 = vld [vmem:[%s0 + $0x28] sm:$0xf]
  %v29 = vld [vmem:[%s0 + $0x2c] sm:$0xf]
  %v30 = vld [vmem:[%s0 + $0x30] sm:$0xf]
  %v31 = vld [vmem:[%s0 + $0x34] sm:$0xf]
  %v32 = vld [vmem:[%s0 + $0x38] sm:$0xf]
  %v33 = vld [vmem:[%s0 + $0x3c] sm:$0xf]
  %v34 = vld [vmem:[%s0 + $0x40] sm:$0xf]
  %v35 = vld [vmem:[%s0 + $0x44] sm:$0xf]
  %v36 = vld [vmem:[%s0 + $0x48] sm:$0xf]
  %v37 = vld [vmem:[%s0 + $0x4c] sm:$0xf]
  %v38 = vld [vmem:[%s0 + $0x50] sm:$0xf]
  %v39 = vld [vmem:[%s0 + $0x54] sm:$0xf]
  %v40 = vld [vmem:[%s0 + $0x58] sm:$0xf]
  %v41 = vld [vmem:[%s0 + $0x5c] sm:$0xf]
  %v42 = vld [vmem:[%s0 + $0x60] sm:$0xf]
  %v43 = vld [vmem:[%s0 + $0x64] sm:$0xf]
  %v44 = vld [vmem:[%s0 + $0x68] sm:$0xf]
  %v45 = vld [vmem:[%s0 + $0x6c] sm:$0xf]
  %v46 = vld [vmem:[%s0 + $0x70] sm:$0xf]
  %v47 = vld [vmem:[%s0 + $0x74] sm:$0xf]
  %v48 = vld [vmem:[%s0 + $0x78] sm:$0xf]
  %v49 = vld [vmem:[%s0 + $0x7c] sm:$0xf]
  %v50 = vld [vmem:[%s0 + $0x80] sm:$0xf]
  %v51 = vld [vmem:[%s0 + $0x84] sm:$0xf]
  %v52 = vld [vmem:[%s0 + $0x88] sm:$0xf]
  %v53 = vld [vmem:[%s0 + $0x8c] sm:$0xf]
  %v54 = vld [vmem:[%s0 + $0x90] sm:$0xf]
  %v55 = vld [vmem:[%s0 + $0x94] sm:$0xf]
  %v56 = vld [vmem:[%s0 + $0x98] sm:$0xf]
  %v57 = vld [vmem:[%s0 + $0x9c] sm:$0xf]
  %v58 = vld [vmem:[%s0 + $0xa0] sm:$0xf]
  %v59 = vld [vmem:[%s0 + $0xa4] sm:$0xf]
  %v60 = vld [vmem:[%s0 + $0xa8] sm:$0xf]
  %v61 = vld [vmem:[%s0 + $0xac] sm:$0xf]
  %v62 = vld [vmem:[%s0 + $0xb0] sm:$0xf]
  %v63 = vld [vmem:[%s0 + $0xb4] sm:$0xf]
  %v64 = vld [vmem:[%s0 + $0xb8] sm:$0xf]
  %v65 = vld [vmem:[%s0 + $0xbc] sm:$0xf]
  %v66 = vld [vmem:[%s0 + $0xc0] sm:$0xf]
  %v67 = vld [vmem:[%s0 + $0xc4] sm:$0xf]
  %v68 = vld [vmem:[%s0 + $0xc8] sm:$0xf]
  %v69 = vld [vmem:[%s0 + $0xcc] sm:$0xf]
  %v70 = vld [vmem:[%s0 + $0xd0] sm:$0xf]
  %v71 = vld [vmem:[%s0 + $0xd4] sm:$0xf]
  %v72 = vld [vmem:[%s0 + $0xd8] sm:$0xf]
  %v73 = vld [vmem:[%s0 + $0xdc] sm:$0xf]
  %v74 = vld [vmem:[%s0 + $0xe0] sm:$0xf]
  %v75 = vld [vmem:[%s0 + $0xe4] sm:$0xf]
  %v76 = vld [vmem:[%s0 + $0xe8] sm:$0xf]
  %v77 = vld [vmem:[%s0 + $0xec] sm:$0xf]
  %v78 = vld [vmem:[%s0 + $0xf0] sm:$0xf]
  %v79 = vld [vmem:[%s0 + $0xf4] sm:$0xf]
  %v80 = vld [vmem:[%s0 + $0xf8] sm:$0xf]
  %v81 = vld [vmem:[%s0 + $0xfc] sm:$0xf]
  %v82 = vld [vmem:[%s1] sm:$0xf]
  %v83 = vld [vmem:[%s1 + $0x4] sm:$0x1]
  %v148 = vunpack.c.l.b16 %v18
  %v149 = vunpack.c.l.b16 %v19
  %v150 = vunpack.c.l.b16 %v20
  %v151 = vunpack.c.l.b16 %v21
  %v152 = vunpack.c.l.b16 %v22
  %v153 = vunpack.c.l.b16 %v23
  %v154 = vunpack.c.l.b16 %v24
  %v155 = vunpack.c.l.b16 %v25
  %v156 = vunpack.c.l.b16 %v26
  %v157 = vunpack.c.l.b16 %v27
  %v158 = vunpack.c.l.b16 %v28
  %v159 = vunpack.c.l.b16 %v29
  %v160 = vunpack.c.l.b16 %v30
  %v161 = vunpack.c.l.b16 %v31
  %v162 = vunpack.c.l.b16 %v32
  %v163 = vunpack.c.l.b16 %v33
  %v164 = vunpack.c.l.b16 %v34
  %v165 = vunpack.c.l.b16 %v35
  %v166 = vunpack.c.l.b16 %v36
  %v167 = vunpack.c.l.b16 %v37
  %v168 = vunpack.c.l.b16 %v38
  %v169 = vunpack.c.l.b16 %v39
  %v170 = vunpack.c.l.b16 %v40
  %v171 = vunpack.c.l.b16 %v41
  %v172 = vunpack.c.l.b16 %v42
  %v173 = vunpack.c.l.b16 %v43
  %v174 = vunpack.c.l.b16 %v44
  %v175 = vunpack.c.l.b16 %v45
  %v176 = vunpack.c.l.b16 %v46
  %v177 = vunpack.c.l.b16 %v47
  %v178 = vunpack.c.l.b16 %v48
  %v179 = vunpack.c.l.b16 %v49
  %v180 = vunpack.c.l.b16 %v50
  %v181 = vunpack.c.l.b16 %v51
  %v182 = vunpack.c.l.b16 %v52
  %v183 = vunpack.c.l.b16 %v53
  %v184 = vunpack.c.l.b16 %v54
  %v185 = vunpack.c.l.b16 %v55
  %v186 = vunpack.c.l.b16 %v56
  %v187 = vunpack.c.l.b16 %v57
  %v188 = vunpack.c.l.b16 %v58
  %v189 = vunpack.c.l.b16 %v59
  %v190 = vunpack.c.l.b16 %v60
  %v191 = vunpack.c.l.b16 %v61
  %v192 = vunpack.c.l.b16 %v62
  %v193 = vunpack.c.l.b16 %v63
  %v194 = vunpack.c.l.b16 %v64
  %v195 = vunpack.c.l.b16 %v65
  %v196 = vunpack.c.l.b16 %v66
  %v197 = vunpack.c.l.b16 %v67
  %v198 = vunpack.c.l.b16 %v68
  %v199 = vunpack.c.l.b16 %v69
  %v200 = vunpack.c.l.b16 %v70
  %v201 = vunpack.c.l.b16 %v71
  %v202 = vunpack.c.l.b16 %v72
  %v203 = vunpack.c.l.b16 %v73
  %v204 = vunpack.c.l.b16 %v74
  %v205 = vunpack.c.l.b16 %v75
  %v206 = vunpack.c.l.b16 %v76
  %v207 = vunpack.c.l.b16 %v77
  %v208 = vunpack.c.l.b16 %v78
  %v209 = vunpack.c.l.b16 %v79
  %v210 = vunpack.c.l.b16 %v80
  %v211 = vunpack.c.l.b16 %v81
  %v212 = vpack.c.b16 %v149, %v148
  %v213 = vpack.c.b16 %v151, %v150
  %v214 = vpack.c.b16 %v153, %v152
  %v215 = vpack.c.b16 %v155, %v154
  %v216 = vpack.c.b16 %v157, %v156
  %v217 = vpack.c.b16 %v159, %v158
  %v218 = vpack.c.b16 %v161, %v160
  %v219 = vpack.c.b16 %v163, %v162
  %v220 = vpack.c.b16 %v165, %v164
  %v221 = vpack.c.b16 %v167, %v166
  %v222 = vpack.c.b16 %v169, %v168
  %v223 = vpack.c.b16 %v171, %v170
  %v224 = vpack.c.b16 %v173, %v172
  %v225 = vpack.c.b16 %v175, %v174
  %v226 = vpack.c.b16 %v177, %v176
  %v227 = vpack.c.b16 %v179, %v178
  %v228 = vpack.c.b16 %v181, %v180
  %v229 = vpack.c.b16 %v183, %v182
  %v230 = vpack.c.b16 %v185, %v184
  %v231 = vpack.c.b16 %v187, %v186
  %v232 = vpack.c.b16 %v189, %v188
  %v233 = vpack.c.b16 %v191, %v190
  %v234 = vpack.c.b16 %v193, %v192
  %v235 = vpack.c.b16 %v195, %v194
  %v236 = vpack.c.b16 %v197, %v196
  %v237 = vpack.c.b16 %v199, %v198
  %v238 = vpack.c.b16 %v201, %v200
  %v239 = vpack.c.b16 %v203, %v202
  %v240 = vpack.c.b16 %v205, %v204
  %v241 = vpack.c.b16 %v207, %v206
  %v242 = vpack.c.b16 %v209, %v208
  %v243 = vpack.c.b16 %v211, %v210
  %v246 = vunpack.c.l.b16 %v82
  %v247 = vunpack.c.l.b16 %v83
  %v248 = vpack.c.b16 %v247, %v246
  %vm249 = vcmask 72704
  %v251 = vsel %vm249, %v212, 0
  %v254 = vsel %vm249, %v213, 0
  %v257 = vsel %vm249, %v214, 0
  %v260 = vsel %vm249, %v215, 0
  %v263 = vsel %vm249, %v216, 0
  %v266 = vsel %vm249, %v217, 0
  %v269 = vsel %vm249, %v218, 0
  %v272 = vsel %vm249, %v219, 0
  %v275 = vsel %vm249, %v220, 0
  %v278 = vsel %vm249, %v221, 0
  %v281 = vsel %vm249, %v222, 0
  %v284 = vsel %vm249, %v223, 0
  %v287 = vsel %vm249, %v224, 0
  %v290 = vsel %vm249, %v225, 0
  %v293 = vsel %vm249, %v226, 0
  %v296 = vsel %vm249, %v227, 0
  %v299 = vsel %vm249, %v228, 0
  %v302 = vsel %vm249, %v229, 0
  %v305 = vsel %vm249, %v230, 0
  %v308 = vsel %vm249, %v231, 0
  %v311 = vsel %vm249, %v232, 0
  %v314 = vsel %vm249, %v233, 0
  %v317 = vsel %vm249, %v234, 0
  %v320 = vsel %vm249, %v235, 0
  %v323 = vsel %vm249, %v236, 0
  %v326 = vsel %vm249, %v237, 0
  %v329 = vsel %vm249, %v238, 0
  %v332 = vsel %vm249, %v239, 0
  %v335 = vsel %vm249, %v240, 0
  %v338 = vsel %vm249, %v241, 0
  %v341 = vsel %vm249, %v242, 0
  %v344 = vsel %vm249, %v243, 0
  %vm346 = vcmask 1043456
  %vm347 = vcmask 1044480
  %v348 = vsel %vm346, 4294967295, 65535
  %v349 = vsel %vm347, %v348, 0
  %v351 = vand.u32 %v248, %v349
  %353 = vmatprep.subr.bf16.mxu0 0
  %354 = vmatpush1.bf16.msra.mxu0 0
  %355 = vmatprep.subr.bf16.mxu0 0
  %356 = vmatpush1.bf16.msra.mxu0 0
  %357 = vmatprep.subr.bf16.mxu0 0
  %358 = vmatpush1.bf16.msra.mxu0 0
  %359 = vmatprep.subr.bf16.mxu0 0
  %360 = vmatpush1.bf16.msra.mxu0 0
  %361 = vmatprep.subr.bf16.mxu0 0
  %362 = vmatpush1.bf16.msra.mxu0 0
  %363 = vmatprep.subr.bf16.mxu0 0
  %364 = vmatpush1.bf16.msra.mxu0 0
  %365 = vmatprep.subr.bf16.mxu0 0
  %366 = vmatpush1.bf16.msra.mxu0 0
  %367 = vmatprep.subr.bf16.mxu0 0
  %368 = vmatpush1.bf16.msra.mxu0 %v351
  %369 = vmatprep.subr.bf16.mxu0 0
  %370 = vmatpush2.bf16.msra.mxu0 0
  %371 = vmatprep.subr.bf16.mxu0 0
  %372 = vmatpush2.bf16.msra.mxu0 0
  %373 = vmatprep.subr.bf16.mxu0 0
  %374 = vmatpush2.bf16.msra.mxu0 0
  %375 = vmatprep.subr.bf16.mxu0 0
  %376 = vmatpush2.bf16.msra.mxu0 0
  %377 = vmatprep.subr.bf16.mxu0 0
  %378 = vmatpush2.bf16.msra.mxu0 0
  %379 = vmatprep.subr.bf16.mxu0 0
  %380 = vmatpush2.bf16.msra.mxu0 0
  %381 = vmatprep.subr.bf16.mxu0 0
  %382 = vmatpush2.bf16.msra.mxu0 0
  %383 = vmatprep.subr.bf16.mxu0 0
  %384 = vmatpush2.bf16.msra.mxu0 0
  %385 = vmatprep.mubr.bf16.mxu0 0
  %386 = vmatmul.mubr.bf16.gmra.mxu0 %v251
  %v387 = vpop.f32.mrf.mxu0
  %v388 = vadd.f32 0.0, %v387
  %v389 = vpop.f32.mrf.mxu0
  %v390 = vpop.f32.mrf.mxu0
  %v391 = vadd.f32 0.0, %v390
  %v392 = vpop.f32.mrf.mxu0
  %393 = vmatprep.mubr.bf16.mxu0 0
  %394 = vmatmul.mubr.bf16.gmra.mxu0 %v254
  %v395 = vpop.f32.mrf.mxu0
  %v396 = vadd.f32 0.0, %v395
  %v397 = vpop.f32.mrf.mxu0
  %v398 = vpop.f32.mrf.mxu0
  %v399 = vadd.f32 0.0, %v398
  %v400 = vpop.f32.mrf.mxu0
  %401 = vmatprep.mubr.bf16.mxu0 0
  %402 = vmatmul.mubr.bf16.gmra.mxu0 %v257
  %v403 = vpop.f32.mrf.mxu0
  %v404 = vadd.f32 0.0, %v403
  %v405 = vpop.f32.mrf.mxu0
  %v406 = vpop.f32.mrf.mxu0
  %v407 = vadd.f32 0.0, %v406
  %v408 = vpop.f32.mrf.mxu0
  %409 = vmatprep.mubr.bf16.mxu0 0
  %410 = vmatmul.mubr.bf16.gmra.mxu0 %v260
  %v411 = vpop.f32.mrf.mxu0
  %v412 = vadd.f32 0.0, %v411
  %v413 = vpop.f32.mrf.mxu0
  %v414 = vpop.f32.mrf.mxu0
  %v415 = vadd.f32 0.0, %v414
  %v416 = vpop.f32.mrf.mxu0
  %417 = vmatprep.mubr.bf16.mxu0 0
  %418 = vmatmul.mubr.bf16.gmra.mxu0 %v263
  %v419 = vpop.f32.mrf.mxu0
  %v420 = vadd.f32 0.0, %v419
  %v421 = vpop.f32.mrf.mxu0
  %v422 = vpop.f32.mrf.mxu0
  %v423 = vadd.f32 0.0, %v422
  %v424 = vpop.f32.mrf.mxu0
  %425 = vmatprep.mubr.bf16.mxu0 0
  %426 = vmatmul.mubr.bf16.gmra.mxu0 %v266
  %v427 = vpop.f32.mrf.mxu0
  %v428 = vadd.f32 0.0, %v427
  %v429 = vpop.f32.mrf.mxu0
  %v430 = vpop.f32.mrf.mxu0
  %v431 = vadd.f32 0.0, %v430
  %v432 = vpop.f32.mrf.mxu0
  %433 = vmatprep.mubr.bf16.mxu0 0
  %434 = vmatmul.mubr.bf16.gmra.mxu0 %v269
  %v435 = vpop.f32.mrf.mxu0
  %v436 = vadd.f32 0.0, %v435
  %v437 = vpop.f32.mrf.mxu0
  %v438 = vpop.f32.mrf.mxu0
  %v439 = vadd.f32 0.0, %v438
  %v440 = vpop.f32.mrf.mxu0
  %441 = vmatprep.mubr.bf16.mxu0 0
  %442 = vmatmul.mubr.bf16.gmra.mxu0 %v272
  %v443 = vpop.f32.mrf.mxu0
  %v444 = vadd.f32 0.0, %v443
  %v445 = vpop.f32.mrf.mxu0
  %v446 = vpop.f32.mrf.mxu0
  %v447 = vadd.f32 0.0, %v446
  %v448 = vpop.f32.mrf.mxu0
  %449 = vmatprep.mubr.bf16.mxu0 0
  %450 = vmatmul.mubr.bf16.gmra.mxu0 %v275
  %v451 = vpop.f32.mrf.mxu0
  %v452 = vadd.f32 0.0, %v451
  %v453 = vpop.f32.mrf.mxu0
  %v454 = vpop.f32.mrf.mxu0
  %v455 = vadd.f32 0.0, %v454
  %v456 = vpop.f32.mrf.mxu0
  %457 = vmatprep.mubr.bf16.mxu0 0
  %458 = vmatmul.mubr.bf16.gmra.mxu0 %v278
  %v459 = vpop.f32.mrf.mxu0
  %v460 = vadd.f32 0.0, %v459
  %v461 = vpop.f32.mrf.mxu0
  %v462 = vpop.f32.mrf.mxu0
  %v463 = vadd.f32 0.0, %v462
  %v464 = vpop.f32.mrf.mxu0
  %465 = vmatprep.mubr.bf16.mxu0 0
  %466 = vmatmul.mubr.bf16.gmra.mxu0 %v281
  %v467 = vpop.f32.mrf.mxu0
  %v468 = vadd.f32 0.0, %v467
  %v469 = vpop.f32.mrf.mxu0
  %v470 = vpop.f32.mrf.mxu0
  %v471 = vadd.f32 0.0, %v470
  %v472 = vpop.f32.mrf.mxu0
  %473 = vmatprep.mubr.bf16.mxu0 0
  %474 = vmatmul.mubr.bf16.gmra.mxu0 %v284
  %v475 = vpop.f32.mrf.mxu0
  %v476 = vadd.f32 0.0, %v475
  %v477 = vpop.f32.mrf.mxu0
  %v478 = vpop.f32.mrf.mxu0
  %v479 = vadd.f32 0.0, %v478
  %v480 = vpop.f32.mrf.mxu0
  %481 = vmatprep.mubr.bf16.mxu0 0
  %482 = vmatmul.mubr.bf16.gmra.mxu0 %v287
  %v483 = vpop.f32.mrf.mxu0
  %v484 = vadd.f32 0.0, %v483
  %v485 = vpop.f32.mrf.mxu0
  %v486 = vpop.f32.mrf.mxu0
  %v487 = vadd.f32 0.0, %v486
  %v488 = vpop.f32.mrf.mxu0
  %489 = vmatprep.mubr.bf16.mxu0 0
  %490 = vmatmul.mubr.bf16.gmra.mxu0 %v290
  %v491 = vpop.f32.mrf.mxu0
  %v492 = vadd.f32 0.0, %v491
  %v493 = vpop.f32.mrf.mxu0
  %v494 = vpop.f32.mrf.mxu0
  %v495 = vadd.f32 0.0, %v494
  %v496 = vpop.f32.mrf.mxu0
  %497 = vmatprep.mubr.bf16.mxu0 0
  %498 = vmatmul.mubr.bf16.gmra.mxu0 %v293
  %v499 = vpop.f32.mrf.mxu0
  %v500 = vadd.f32 0.0, %v499
  %v501 = vpop.f32.mrf.mxu0
  %v502 = vpop.f32.mrf.mxu0
  %v503 = vadd.f32 0.0, %v502
  %v504 = vpop.f32.mrf.mxu0
  %505 = vmatprep.mubr.bf16.mxu0 0
  %506 = vmatmul.mubr.bf16.gmra.mxu0 %v296
  %v507 = vpop.f32.mrf.mxu0
  %v508 = vadd.f32 0.0, %v507
  %v509 = vpop.f32.mrf.mxu0
  %v510 = vpop.f32.mrf.mxu0
  %v511 = vadd.f32 0.0, %v510
  %v512 = vpop.f32.mrf.mxu0
  %513 = vmatprep.mubr.bf16.mxu0 0
  %514 = vmatmul.mubr.bf16.gmra.mxu0 %v299
  %v515 = vpop.f32.mrf.mxu0
  %v516 = vadd.f32 0.0, %v515
  %v517 = vpop.f32.mrf.mxu0
  %v518 = vpop.f32.mrf.mxu0
  %v519 = vadd.f32 0.0, %v518
  %v520 = vpop.f32.mrf.mxu0
  %521 = vmatprep.mubr.bf16.mxu0 0
  %522 = vmatmul.mubr.bf16.gmra.mxu0 %v302
  %v523 = vpop.f32.mrf.mxu0
  %v524 = vadd.f32 0.0, %v523
  %v525 = vpop.f32.mrf.mxu0
  %v526 = vpop.f32.mrf.mxu0
  %v527 = vadd.f32 0.0, %v526
  %v528 = vpop.f32.mrf.mxu0
  %529 = vmatprep.mubr.bf16.mxu0 0
  %530 = vmatmul.mubr.bf16.gmra.mxu0 %v305
  %v531 = vpop.f32.mrf.mxu0
  %v532 = vadd.f32 0.0, %v531
  %v533 = vpop.f32.mrf.mxu0
  %v534 = vpop.f32.mrf.mxu0
  %v535 = vadd.f32 0.0, %v534
  %v536 = vpop.f32.mrf.mxu0
  %537 = vmatprep.mubr.bf16.mxu0 0
  %538 = vmatmul.mubr.bf16.gmra.mxu0 %v308
  %v539 = vpop.f32.mrf.mxu0
  %v540 = vadd.f32 0.0, %v539
  %v541 = vpop.f32.mrf.mxu0
  %v542 = vpop.f32.mrf.mxu0
  %v543 = vadd.f32 0.0, %v542
  %v544 = vpop.f32.mrf.mxu0
  %545 = vmatprep.mubr.bf16.mxu0 0
  %546 = vmatmul.mubr.bf16.gmra.mxu0 %v311
  %v547 = vpop.f32.mrf.mxu0
  %v548 = vadd.f32 0.0, %v547
  %v549 = vpop.f32.mrf.mxu0
  %v550 = vpop.f32.mrf.mxu0
  %v551 = vadd.f32 0.0, %v550
  %v552 = vpop.f32.mrf.mxu0
  %553 = vmatprep.mubr.bf16.mxu0 0
  %554 = vmatmul.mubr.bf16.gmra.mxu0 %v314
  %v555 = vpop.f32.mrf.mxu0
  %v556 = vadd.f32 0.0, %v555
  %v557 = vpop.f32.mrf.mxu0
  %v558 = vpop.f32.mrf.mxu0
  %v559 = vadd.f32 0.0, %v558
  %v560 = vpop.f32.mrf.mxu0
  %561 = vmatprep.mubr.bf16.mxu0 0
  %562 = vmatmul.mubr.bf16.gmra.mxu0 %v317
  %v563 = vpop.f32.mrf.mxu0
  %v564 = vadd.f32 0.0, %v563
  %v565 = vpop.f32.mrf.mxu0
  %v566 = vpop.f32.mrf.mxu0
  %v567 = vadd.f32 0.0, %v566
  %v568 = vpop.f32.mrf.mxu0
  %569 = vmatprep.mubr.bf16.mxu0 0
  %570 = vmatmul.mubr.bf16.gmra.mxu0 %v320
  %v571 = vpop.f32.mrf.mxu0
  %v572 = vadd.f32 0.0, %v571
  %v573 = vpop.f32.mrf.mxu0
  %v574 = vpop.f32.mrf.mxu0
  %v575 = vadd.f32 0.0, %v574
  %v576 = vpop.f32.mrf.mxu0
  %577 = vmatprep.mubr.bf16.mxu0 0
  %578 = vmatmul.mubr.bf16.gmra.mxu0 %v323
  %v579 = vpop.f32.mrf.mxu0
  %v580 = vadd.f32 0.0, %v579
  %v581 = vpop.f32.mrf.mxu0
  %v582 = vpop.f32.mrf.mxu0
  %v583 = vadd.f32 0.0, %v582
  %v584 = vpop.f32.mrf.mxu0
  %585 = vmatprep.mubr.bf16.mxu0 0
  %586 = vmatmul.mubr.bf16.gmra.mxu0 %v326
  %v587 = vpop.f32.mrf.mxu0
  %v588 = vadd.f32 0.0, %v587
  %v589 = vpop.f32.mrf.mxu0
  %v590 = vpop.f32.mrf.mxu0
  %v591 = vadd.f32 0.0, %v590
  %v592 = vpop.f32.mrf.mxu0
  %593 = vmatprep.mubr.bf16.mxu0 0
  %594 = vmatmul.mubr.bf16.gmra.mxu0 %v329
  %v595 = vpop.f32.mrf.mxu0
  %v596 = vadd.f32 0.0, %v595
  %v597 = vpop.f32.mrf.mxu0
  %v598 = vpop.f32.mrf.mxu0
  %v599 = vadd.f32 0.0, %v598
  %v600 = vpop.f32.mrf.mxu0
  %601 = vmatprep.mubr.bf16.mxu0 0
  %602 = vmatmul.mubr.bf16.gmra.mxu0 %v332
  %v603 = vpop.f32.mrf.mxu0
  %v604 = vadd.f32 0.0, %v603
  %v605 = vpop.f32.mrf.mxu0
  %v606 = vpop.f32.mrf.mxu0
  %v607 = vadd.f32 0.0, %v606
  %v608 = vpop.f32.mrf.mxu0
  %609 = vmatprep.mubr.bf16.mxu0 0
  %610 = vmatmul.mubr.bf16.gmra.mxu0 %v335
  %v611 = vpop.f32.mrf.mxu0
  %v612 = vadd.f32 0.0, %v611
  %v613 = vpop.f32.mrf.mxu0
  %v614 = vpop.f32.mrf.mxu0
  %v615 = vadd.f32 0.0, %v614
  %v616 = vpop.f32.mrf.mxu0
  %617 = vmatprep.mubr.bf16.mxu0 0
  %618 = vmatmul.mubr.bf16.gmra.mxu0 %v338
  %v619 = vpop.f32.mrf.mxu0
  %v620 = vadd.f32 0.0, %v619
  %v621 = vpop.f32.mrf.mxu0
  %v622 = vpop.f32.mrf.mxu0
  %v623 = vadd.f32 0.0, %v622
  %v624 = vpop.f32.mrf.mxu0
  %625 = vmatprep.mubr.bf16.mxu0 0
  %626 = vmatmul.mubr.bf16.gmra.mxu0 %v341
  %v627 = vpop.f32.mrf.mxu0
  %v628 = vadd.f32 0.0, %v627
  %v629 = vpop.f32.mrf.mxu0
  %v630 = vpop.f32.mrf.mxu0
  %v631 = vadd.f32 0.0, %v630
  %v632 = vpop.f32.mrf.mxu0
  %633 = vmatprep.mubr.bf16.mxu0 0
  %634 = vmatmul.mubr.bf16.gmra.mxu0 %v344
  %v635 = vpop.f32.mrf.mxu0
  %v636 = vadd.f32 0.0, %v635
  %v637 = vpop.f32.mrf.mxu0
  %v638 = vpop.f32.mrf.mxu0
  %v639 = vadd.f32 0.0, %v638
  %v640 = vpop.f32.mrf.mxu0
  %641 = vdwg.mxu0
  %v642 = vld [vmem:[%s2] sm:$0x1]
  %v644 = vlaneseq
  %v645 = vshrl.u32 %v644, 7
  %v646 = vsub.s32 0, %v645
  %v647 = vrot.slane %v642, %v646
  %v649 = vmul.f32 %v388, %v647
  %v650 = vmul.f32 %v391, %v647
  %v651 = vmul.f32 %v396, %v647
  %v652 = vmul.f32 %v399, %v647
  %v653 = vmul.f32 %v404, %v647
  %v654 = vmul.f32 %v407, %v647
  %v655 = vmul.f32 %v412, %v647
  %v656 = vmul.f32 %v415, %v647
  %v657 = vmul.f32 %v420, %v647
  %v658 = vmul.f32 %v423, %v647
  %v659 = vmul.f32 %v428, %v647
  %v660 = vmul.f32 %v431, %v647
  %v661 = vmul.f32 %v436, %v647
  %v662 = vmul.f32 %v439, %v647
  %v663 = vmul.f32 %v444, %v647
  %v664 = vmul.f32 %v447, %v647
  %v665 = vmul.f32 %v452, %v647
  %v666 = vmul.f32 %v455, %v647
  %v667 = vmul.f32 %v460, %v647
  %v668 = vmul.f32 %v463, %v647
  %v669 = vmul.f32 %v468, %v647
  %v670 = vmul.f32 %v471, %v647
  %v671 = vmul.f32 %v476, %v647
  %v672 = vmul.f32 %v479, %v647
  %v673 = vmul.f32 %v484, %v647
  %v674 = vmul.f32 %v487, %v647
  %v675 = vmul.f32 %v492, %v647
  %v676 = vmul.f32 %v495, %v647
  %v677 = vmul.f32 %v500, %v647
  %v678 = vmul.f32 %v503, %v647
  %v679 = vmul.f32 %v508, %v647
  %v680 = vmul.f32 %v511, %v647
  %v681 = vmul.f32 %v516, %v647
  %v682 = vmul.f32 %v519, %v647
  %v683 = vmul.f32 %v524, %v647
  %v684 = vmul.f32 %v527, %v647
  %v685 = vmul.f32 %v532, %v647
  %v686 = vmul.f32 %v535, %v647
  %v687 = vmul.f32 %v540, %v647
  %v688 = vmul.f32 %v543, %v647
  %v689 = vmul.f32 %v548, %v647
  %v690 = vmul.f32 %v551, %v647
  %v691 = vmul.f32 %v556, %v647
  %v692 = vmul.f32 %v559, %v647
  %v693 = vmul.f32 %v564, %v647
  %v694 = vmul.f32 %v567, %v647
  %v695 = vmul.f32 %v572, %v647
  %v696 = vmul.f32 %v575, %v647
  %v697 = vmul.f32 %v580, %v647
  %v698 = vmul.f32 %v583, %v647
  %v699 = vmul.f32 %v588, %v647
  %v700 = vmul.f32 %v591, %v647
  %v701 = vmul.f32 %v596, %v647
  %v702 = vmul.f32 %v599, %v647
  %v703 = vmul.f32 %v604, %v647
  %v704 = vmul.f32 %v607, %v647
  %v705 = vmul.f32 %v612, %v647
  %v706 = vmul.f32 %v615, %v647
  %v707 = vmul.f32 %v620, %v647
  %v708 = vmul.f32 %v623, %v647
  %v709 = vmul.f32 %v628, %v647
  %v710 = vmul.f32 %v631, %v647
  %v711 = vmul.f32 %v636, %v647
  %v712 = vmul.f32 %v639, %v647
  %v713 = vld [vmem:[%s3] sm:$0x1]
  %v715 = vlaneseq
  %v716 = vshrl.u32 %v715, 7
  %v717 = vsub.s32 0, %v716
  %v718 = vrot.slane %v713, %v717
  %v720 = vadd.f32 %v649, %v718
  %v721 = vadd.f32 %v650, %v718
  %v722 = vadd.f32 %v651, %v718
  %v723 = vadd.f32 %v652, %v718
  %v724 = vadd.f32 %v653, %v718
  %v725 = vadd.f32 %v654, %v718
  %v726 = vadd.f32 %v655, %v718
  %v727 = vadd.f32 %v656, %v718
  %v728 = vadd.f32 %v657, %v718
  %v729 = vadd.f32 %v658, %v718
  %v730 = vadd.f32 %v659, %v718
  %v731 = vadd.f32 %v660, %v718
  %v732 = vadd.f32 %v661, %v718
  %v733 = vadd.f32 %v662, %v718
  %v734 = vadd.f32 %v663, %v718
  %v735 = vadd.f32 %v664, %v718
  %v736 = vadd.f32 %v665, %v718
  %v737 = vadd.f32 %v666, %v718
  %v738 = vadd.f32 %v667, %v718
  %v739 = vadd.f32 %v668, %v718
  %v740 = vadd.f32 %v669, %v718
  %v741 = vadd.f32 %v670, %v718
  %v742 = vadd.f32 %v671, %v718
  %v743 = vadd.f32 %v672, %v718
  %v744 = vadd.f32 %v673, %v718
  %v745 = vadd.f32 %v674, %v718
  %v746 = vadd.f32 %v675, %v718
  %v747 = vadd.f32 %v676, %v718
  %v748 = vadd.f32 %v677, %v718
  %v749 = vadd.f32 %v678, %v718
  %v750 = vadd.f32 %v679, %v718
  %v751 = vadd.f32 %v680, %v718
  %v752 = vadd.f32 %v681, %v718
  %v753 = vadd.f32 %v682, %v718
  %v754 = vadd.f32 %v683, %v718
  %v755 = vadd.f32 %v684, %v718
  %v756 = vadd.f32 %v685, %v718
  %v757 = vadd.f32 %v686, %v718
  %v758 = vadd.f32 %v687, %v718
  %v759 = vadd.f32 %v688, %v718
  %v760 = vadd.f32 %v689, %v718
  %v761 = vadd.f32 %v690, %v718
  %v762 = vadd.f32 %v691, %v718
  %v763 = vadd.f32 %v692, %v718
  %v764 = vadd.f32 %v693, %v718
  %v765 = vadd.f32 %v694, %v718
  %v766 = vadd.f32 %v695, %v718
  %v767 = vadd.f32 %v696, %v718
  %v768 = vadd.f32 %v697, %v718
  %v769 = vadd.f32 %v698, %v718
  %v770 = vadd.f32 %v699, %v718
  %v771 = vadd.f32 %v700, %v718
  %v772 = vadd.f32 %v701, %v718
  %v773 = vadd.f32 %v702, %v718
  %v774 = vadd.f32 %v703, %v718
  %v775 = vadd.f32 %v704, %v718
  %v776 = vadd.f32 %v705, %v718
  %v777 = vadd.f32 %v706, %v718
  %v778 = vadd.f32 %v707, %v718
  %v779 = vadd.f32 %v708, %v718
  %v780 = vadd.f32 %v709, %v718
  %v781 = vadd.f32 %v710, %v718
  %v782 = vadd.f32 %v711, %v718
  %v783 = vadd.f32 %v712, %v718
  %v784 = vmax.f32 %v720, 0.0
  %v785 = vmax.f32 %v721, 0.0
  %v786 = vmax.f32 %v722, 0.0
  %v787 = vmax.f32 %v723, 0.0
  %v788 = vmax.f32 %v724, 0.0
  %v789 = vmax.f32 %v725, 0.0
  %v790 = vmax.f32 %v726, 0.0
  %v791 = vmax.f32 %v727, 0.0
  %v792 = vmax.f32 %v728, 0.0
  %v793 = vmax.f32 %v729, 0.0
  %v794 = vmax.f32 %v730, 0.0
  %v795 = vmax.f32 %v731, 0.0
  %v796 = vmax.f32 %v732, 0.0
  %v797 = vmax.f32 %v733, 0.0
  %v798 = vmax.f32 %v734, 0.0
  %v799 = vmax.f32 %v735, 0.0
  %v800 = vmax.f32 %v736, 0.0
  %v801 = vmax.f32 %v737, 0.0
  %v802 = vmax.f32 %v738, 0.0
  %v803 = vmax.f32 %v739, 0.0
  %v804 = vmax.f32 %v740, 0.0
  %v805 = vmax.f32 %v741, 0.0
  %v806 = vmax.f32 %v742, 0.0
  %v807 = vmax.f32 %v743, 0.0
  %v808 = vmax.f32 %v744, 0.0
  %v809 = vmax.f32 %v745, 0.0
  %v810 = vmax.f32 %v746, 0.0
  %v811 = vmax.f32 %v747, 0.0
  %v812 = vmax.f32 %v748, 0.0
  %v813 = vmax.f32 %v749, 0.0
  %v814 = vmax.f32 %v750, 0.0
  %v815 = vmax.f32 %v751, 0.0
  %v816 = vmax.f32 %v752, 0.0
  %v817 = vmax.f32 %v753, 0.0
  %v818 = vmax.f32 %v754, 0.0
  %v819 = vmax.f32 %v755, 0.0
  %v820 = vmax.f32 %v756, 0.0
  %v821 = vmax.f32 %v757, 0.0
  %v822 = vmax.f32 %v758, 0.0
  %v823 = vmax.f32 %v759, 0.0
  %v824 = vmax.f32 %v760, 0.0
  %v825 = vmax.f32 %v761, 0.0
  %v826 = vmax.f32 %v762, 0.0
  %v827 = vmax.f32 %v763, 0.0
  %v828 = vmax.f32 %v764, 0.0
  %v829 = vmax.f32 %v765, 0.0
  %v830 = vmax.f32 %v766, 0.0
  %v831 = vmax.f32 %v767, 0.0
  %v832 = vmax.f32 %v768, 0.0
  %v833 = vmax.f32 %v769, 0.0
  %v834 = vmax.f32 %v770, 0.0
  %v835 = vmax.f32 %v771, 0.0
  %v836 = vmax.f32 %v772, 0.0
  %v837 = vmax.f32 %v773, 0.0
  %v838 = vmax.f32 %v774, 0.0
  %v839 = vmax.f32 %v775, 0.0
  %v840 = vmax.f32 %v776, 0.0
  %v841 = vmax.f32 %v777, 0.0
  %v842 = vmax.f32 %v778, 0.0
  %v843 = vmax.f32 %v779, 0.0
  %v844 = vmax.f32 %v780, 0.0
  %v845 = vmax.f32 %v781, 0.0
  %v846 = vmax.f32 %v782, 0.0
  %v847 = vmax.f32 %v783, 0.0
  %v848 = vpack.c.bf16 %v785, %v784
  %v849 = vpack.c.bf16 %v787, %v786
  %v850 = vpack.c.bf16 %v789, %v788
  %v851 = vpack.c.bf16 %v791, %v790
  %v852 = vpack.c.bf16 %v793, %v792
  %v853 = vpack.c.bf16 %v795, %v794
  %v854 = vpack.c.bf16 %v797, %v796
  %v855 = vpack.c.bf16 %v799, %v798
  %v856 = vpack.c.bf16 %v801, %v800
  %v857 = vpack.c.bf16 %v803, %v802
  %v858 = vpack.c.bf16 %v805, %v804
  %v859 = vpack.c.bf16 %v807, %v806
  %v860 = vpack.c.bf16 %v809, %v808
  %v861 = vpack.c.bf16 %v811, %v810
  %v862 = vpack.c.bf16 %v813, %v812
  %v863 = vpack.c.bf16 %v815, %v814
  %v864 = vpack.c.bf16 %v817, %v816
  %v865 = vpack.c.bf16 %v819, %v818
  %v866 = vpack.c.bf16 %v821, %v820
  %v867 = vpack.c.bf16 %v823, %v822
  %v868 = vpack.c.bf16 %v825, %v824
  %v869 = vpack.c.bf16 %v827, %v826
  %v870 = vpack.c.bf16 %v829, %v828
  %v871 = vpack.c.bf16 %v831, %v830
  %v872 = vpack.c.bf16 %v833, %v832
  %v873 = vpack.c.bf16 %v835, %v834
  %v874 = vpack.c.bf16 %v837, %v836
  %v875 = vpack.c.bf16 %v839, %v838
  %v876 = vpack.c.bf16 %v841, %v840
  %v877 = vpack.c.bf16 %v843, %v842
  %v878 = vpack.c.bf16 %v845, %v844
  %v879 = vpack.c.bf16 %v847, %v846
  %v912 = vunpack.c.l.b16 %v848
  %v913 = vunpack.c.h.b16 %v848
  %v914 = vunpack.c.l.b16 %v849
  %v915 = vunpack.c.h.b16 %v849
  %v916 = vunpack.c.l.b16 %v850
  %v917 = vunpack.c.h.b16 %v850
  %v918 = vunpack.c.l.b16 %v851
  %v919 = vunpack.c.h.b16 %v851
  %v920 = vunpack.c.l.b16 %v852
  %v921 = vunpack.c.h.b16 %v852
  %v922 = vunpack.c.l.b16 %v853
  %v923 = vunpack.c.h.b16 %v853
  %v924 = vunpack.c.l.b16 %v854
  %v925 = vunpack.c.h.b16 %v854
  %v926 = vunpack.c.l.b16 %v855
  %v927 = vunpack.c.h.b16 %v855
  %v928 = vunpack.c.l.b16 %v856
  %v929 = vunpack.c.h.b16 %v856
  %v930 = vunpack.c.l.b16 %v857
  %v931 = vunpack.c.h.b16 %v857
  %v932 = vunpack.c.l.b16 %v858
  %v933 = vunpack.c.h.b16 %v858
  %v934 = vunpack.c.l.b16 %v859
  %v935 = vunpack.c.h.b16 %v859
  %v936 = vunpack.c.l.b16 %v860
  %v937 = vunpack.c.h.b16 %v860
  %v938 = vunpack.c.l.b16 %v861
  %v939 = vunpack.c.h.b16 %v861
  %v940 = vunpack.c.l.b16 %v862
  %v941 = vunpack.c.h.b16 %v862
  %v942 = vunpack.c.l.b16 %v863
  %v943 = vunpack.c.h.b16 %v863
  %v944 = vunpack.c.l.b16 %v864
  %v945 = vunpack.c.h.b16 %v864
  %v946 = vunpack.c.l.b16 %v865
  %v947 = vunpack.c.h.b16 %v865
  %v948 = vunpack.c.l.b16 %v866
  %v949 = vunpack.c.h.b16 %v866
  %v950 = vunpack.c.l.b16 %v867
  %v951 = vunpack.c.h.b16 %v867
  %v952 = vunpack.c.l.b16 %v868
  %v953 = vunpack.c.h.b16 %v868
  %v954 = vunpack.c.l.b16 %v869
  %v955 = vunpack.c.h.b16 %v869
  %v956 = vunpack.c.l.b16 %v870
  %v957 = vunpack.c.h.b16 %v870
  %v958 = vunpack.c.l.b16 %v871
  %v959 = vunpack.c.h.b16 %v871
  %v960 = vunpack.c.l.b16 %v872
  %v961 = vunpack.c.h.b16 %v872
  %v962 = vunpack.c.l.b16 %v873
  %v963 = vunpack.c.h.b16 %v873
  %v964 = vunpack.c.l.b16 %v874
  %v965 = vunpack.c.h.b16 %v874
  %v966 = vunpack.c.l.b16 %v875
  %v967 = vunpack.c.h.b16 %v875
  %v968 = vunpack.c.l.b16 %v876
  %v969 = vunpack.c.h.b16 %v876
  %v970 = vunpack.c.l.b16 %v877
  %v971 = vunpack.c.h.b16 %v877
  %v972 = vunpack.c.l.b16 %v878
  %v973 = vunpack.c.h.b16 %v878
  %v974 = vunpack.c.l.b16 %v879
  %v975 = vunpack.c.h.b16 %v879
  %v976 = vpack.c.b16 %v912, %v912
  %v977 = vpack.c.b16 %v913, %v913
  %v978 = vpack.c.b16 %v914, %v914
  %v979 = vpack.c.b16 %v915, %v915
  %v980 = vpack.c.b16 %v916, %v916
  %v981 = vpack.c.b16 %v917, %v917
  %v982 = vpack.c.b16 %v918, %v918
  %v983 = vpack.c.b16 %v919, %v919
  %v984 = vpack.c.b16 %v920, %v920
  %v985 = vpack.c.b16 %v921, %v921
  %v986 = vpack.c.b16 %v922, %v922
  %v987 = vpack.c.b16 %v923, %v923
  %v988 = vpack.c.b16 %v924, %v924
  %v989 = vpack.c.b16 %v925, %v925
  %v990 = vpack.c.b16 %v926, %v926
  %v991 = vpack.c.b16 %v927, %v927
  %v992 = vpack.c.b16 %v928, %v928
  %v993 = vpack.c.b16 %v929, %v929
  %v994 = vpack.c.b16 %v930, %v930
  %v995 = vpack.c.b16 %v931, %v931
  %v996 = vpack.c.b16 %v932, %v932
  %v997 = vpack.c.b16 %v933, %v933
  %v998 = vpack.c.b16 %v934, %v934
  %v999 = vpack.c.b16 %v935, %v935
  %v1000 = vpack.c.b16 %v936, %v936
  %v1001 = vpack.c.b16 %v937, %v937
  %v1002 = vpack.c.b16 %v938, %v938
  %v1003 = vpack.c.b16 %v939, %v939
  %v1004 = vpack.c.b16 %v940, %v940
  %v1005 = vpack.c.b16 %v941, %v941
  %v1006 = vpack.c.b16 %v942, %v942
  %v1007 = vpack.c.b16 %v943, %v943
  %v1008 = vpack.c.b16 %v944, %v944
  %v1009 = vpack.c.b16 %v945, %v945
  %v1010 = vpack.c.b16 %v946, %v946
  %v1011 = vpack.c.b16 %v947, %v947
  %v1012 = vpack.c.b16 %v948, %v948
  %v1013 = vpack.c.b16 %v949, %v949
  %v1014 = vpack.c.b16 %v950, %v950
  %v1015 = vpack.c.b16 %v951, %v951
  %v1016 = vpack.c.b16 %v952, %v952
  %v1017 = vpack.c.b16 %v953, %v953
  %v1018 = vpack.c.b16 %v954, %v954
  %v1019 = vpack.c.b16 %v955, %v955
  %v1020 = vpack.c.b16 %v956, %v956
  %v1021 = vpack.c.b16 %v957, %v957
  %v1022 = vpack.c.b16 %v958, %v958
  %v1023 = vpack.c.b16 %v959, %v959
  %v1024 = vpack.c.b16 %v960, %v960
  %v1025 = vpack.c.b16 %v961, %v961
  %v1026 = vpack.c.b16 %v962, %v962
  %v1027 = vpack.c.b16 %v963, %v963
  %v1028 = vpack.c.b16 %v964, %v964
  %v1029 = vpack.c.b16 %v965, %v965
  %v1030 = vpack.c.b16 %v966, %v966
  %v1031 = vpack.c.b16 %v967, %v967
  %v1032 = vpack.c.b16 %v968, %v968
  %v1033 = vpack.c.b16 %v969, %v969
  %v1034 = vpack.c.b16 %v970, %v970
  %v1035 = vpack.c.b16 %v971, %v971
  %v1036 = vpack.c.b16 %v972, %v972
  %v1037 = vpack.c.b16 %v973, %v973
  %v1038 = vpack.c.b16 %v974, %v974
  %v1039 = vpack.c.b16 %v975, %v975
  %vm1104 = vcmask 27648
  %1105 = vst.msk [vmem:[%s4] sm:$0xf] %vm1104, %v976
  %1106 = vst.msk [vmem:[%s4 + $0x4] sm:$0xf] %vm1104, %v977
  %1107 = vst.msk [vmem:[%s4 + $0x8] sm:$0xf] %vm1104, %v978
  %1108 = vst.msk [vmem:[%s4 + $0xc] sm:$0xf] %vm1104, %v979
  %1109 = vst.msk [vmem:[%s4 + $0x10] sm:$0xf] %vm1104, %v980
  %1110 = vst.msk [vmem:[%s4 + $0x14] sm:$0xf] %vm1104, %v981
  %1111 = vst.msk [vmem:[%s4 + $0x18] sm:$0xf] %vm1104, %v982
  %1112 = vst.msk [vmem:[%s4 + $0x1c] sm:$0xf] %vm1104, %v983
  %1113 = vst.msk [vmem:[%s4 + $0x20] sm:$0xf] %vm1104, %v984
  %1114 = vst.msk [vmem:[%s4 + $0x24] sm:$0xf] %vm1104, %v985
  %1115 = vst.msk [vmem:[%s4 + $0x28] sm:$0xf] %vm1104, %v986
  %1116 = vst.msk [vmem:[%s4 + $0x2c] sm:$0xf] %vm1104, %v987
  %1117 = vst.msk [vmem:[%s4 + $0x30] sm:$0xf] %vm1104, %v988
  %1118 = vst.msk [vmem:[%s4 + $0x34] sm:$0xf] %vm1104, %v989
  %1119 = vst.msk [vmem:[%s4 + $0x38] sm:$0xf] %vm1104, %v990
  %1120 = vst.msk [vmem:[%s4 + $0x3c] sm:$0xf] %vm1104, %v991
  %1121 = vst.msk [vmem:[%s4 + $0x40] sm:$0xf] %vm1104, %v992
  %1122 = vst.msk [vmem:[%s4 + $0x44] sm:$0xf] %vm1104, %v993
  %1123 = vst.msk [vmem:[%s4 + $0x48] sm:$0xf] %vm1104, %v994
  %1124 = vst.msk [vmem:[%s4 + $0x4c] sm:$0xf] %vm1104, %v995
  %1125 = vst.msk [vmem:[%s4 + $0x50] sm:$0xf] %vm1104, %v996
  %1126 = vst.msk [vmem:[%s4 + $0x54] sm:$0xf] %vm1104, %v997
  %1127 = vst.msk [vmem:[%s4 + $0x58] sm:$0xf] %vm1104, %v998
  %1128 = vst.msk [vmem:[%s4 + $0x5c] sm:$0xf] %vm1104, %v999
  %1129 = vst.msk [vmem:[%s4 + $0x60] sm:$0xf] %vm1104, %v1000
  %1130 = vst.msk [vmem:[%s4 + $0x64] sm:$0xf] %vm1104, %v1001
  %1131 = vst.msk [vmem:[%s4 + $0x68] sm:$0xf] %vm1104, %v1002
  %1132 = vst.msk [vmem:[%s4 + $0x6c] sm:$0xf] %vm1104, %v1003
  %1133 = vst.msk [vmem:[%s4 + $0x70] sm:$0xf] %vm1104, %v1004
  %1134 = vst.msk [vmem:[%s4 + $0x74] sm:$0xf] %vm1104, %v1005
  %1135 = vst.msk [vmem:[%s4 + $0x78] sm:$0xf] %vm1104, %v1006
  %1136 = vst.msk [vmem:[%s4 + $0x7c] sm:$0xf] %vm1104, %v1007
  %1137 = vst.msk [vmem:[%s4 + $0x80] sm:$0xf] %vm1104, %v1008
  %1138 = vst.msk [vmem:[%s4 + $0x84] sm:$0xf] %vm1104, %v1009
  %1139 = vst.msk [vmem:[%s4 + $0x88] sm:$0xf] %vm1104, %v1010
  %1140 = vst.msk [vmem:[%s4 + $0x8c] sm:$0xf] %vm1104, %v1011
  %1141 = vst.msk [vmem:[%s4 + $0x90] sm:$0xf] %vm1104, %v1012
  %1142 = vst.msk [vmem:[%s4 + $0x94] sm:$0xf] %vm1104, %v1013
  %1143 = vst.msk [vmem:[%s4 + $0x98] sm:$0xf] %vm1104, %v1014
  %1144 = vst.msk [vmem:[%s4 + $0x9c] sm:$0xf] %vm1104, %v1015
  %1145 = vst.msk [vmem:[%s4 + $0xa0] sm:$0xf] %vm1104, %v1016
  %1146 = vst.msk [vmem:[%s4 + $0xa4] sm:$0xf] %vm1104, %v1017
  %1147 = vst.msk [vmem:[%s4 + $0xa8] sm:$0xf] %vm1104, %v1018
  %1148 = vst.msk [vmem:[%s4 + $0xac] sm:$0xf] %vm1104, %v1019
  %1149 = vst.msk [vmem:[%s4 + $0xb0] sm:$0xf] %vm1104, %v1020
  %1150 = vst.msk [vmem:[%s4 + $0xb4] sm:$0xf] %vm1104, %v1021
  %1151 = vst.msk [vmem:[%s4 + $0xb8] sm:$0xf] %vm1104, %v1022
  %1152 = vst.msk [vmem:[%s4 + $0xbc] sm:$0xf] %vm1104, %v1023
  %1153 = vst.msk [vmem:[%s4 + $0xc0] sm:$0xf] %vm1104, %v1024
  %1154 = vst.msk [vmem:[%s4 + $0xc4] sm:$0xf] %vm1104, %v1025
  %1155 = vst.msk [vmem:[%s4 + $0xc8] sm:$0xf] %vm1104, %v1026
  %1156 = vst.msk [vmem:[%s4 + $0xcc] sm:$0xf] %vm1104, %v1027
  %1157 = vst.msk [vmem:[%s4 + $0xd0] sm:$0xf] %vm1104, %v1028
  %1158 = vst.msk [vmem:[%s4 + $0xd4] sm:$0xf] %vm1104, %v1029
  %1159 = vst.msk [vmem:[%s4 + $0xd8] sm:$0xf] %vm1104, %v1030
  %1160 = vst.msk [vmem:[%s4 + $0xdc] sm:$0xf] %vm1104, %v1031
  %1161 = vst.msk [vmem:[%s4 + $0xe0] sm:$0xf] %vm1104, %v1032
  %1162 = vst.msk [vmem:[%s4 + $0xe4] sm:$0xf] %vm1104, %v1033
  %1163 = vst.msk [vmem:[%s4 + $0xe8] sm:$0xf] %vm1104, %v1034
  %1164 = vst.msk [vmem:[%s4 + $0xec] sm:$0xf] %vm1104, %v1035
  %1165 = vst.msk [vmem:[%s4 + $0xf0] sm:$0xf] %vm1104, %v1036
  %1166 = vst.msk [vmem:[%s4 + $0xf4] sm:$0xf] %vm1104, %v1037
  %1167 = vst.msk [vmem:[%s4 + $0xf8] sm:$0xf] %vm1104, %v1038
  %1168 = vst.msk [vmem:[%s4 + $0xfc] sm:$0xf] %vm1104, %v1039
  // Predicated region
  $region18: #{tpu_custom_call.1} parent=0 // pred_check
    _
  $region19: #{tpu_custom_call.1} parent=0 // pred_check_branch
    %1170 = sbr.rel (0) target = $region21
  $region20: #{tpu_custom_call.1} parent=0 // pred_region
    _
  $region21: #{tpu_custom_call.1} parent=0 // pred_fallthru
    _
  // Predicated region
  $region22: #{tpu_custom_call.1} parent=0 // pred_check
    _
  $region23: #{tpu_custom_call.1} parent=0 // pred_check_branch
    %1172 = sbr.rel (0) target = $region25
  $region24: #{tpu_custom_call.1} parent=0 // pred_region
    _
  $region25: #{tpu_custom_call.1} parent=0 // pred_fallthru
    _

</llo_original>
